<compile_context>
chip_gen: v6e
topology: v6e:2x2x1
jax: 0.10.0
libtpu: 0.0.40
codegen_flags: <defaults>
</compile_context>

<pallas_src>
import jax
import jax.numpy as jnp
import numpy as np
from jax import lax
from jax.experimental import pallas as pl
from jax.experimental.pallas import tpu as pltpu


def cross_attention_kernel(x_ref, ctx_ref, wq_ref, bq_ref, wk_ref, bk_ref,
                           wv_ref, bv_ref, out_ref, attn_ref):
    """x_ref: (B, N, D); ctx_ref: (B, M, D); wq/wk: (D, Dk); wv: (D, D);
    biases: (1, out_dim); out_ref: (B, N, D); attn_ref: (B, N, M)."""
    B, N, D = x_ref.shape
    _, M, _ = ctx_ref.shape
    Dk = wq_ref.shape[1]

    x = x_ref[...]
    ctx = ctx_ref[...]

    # Projections as plain 2-D MXU matmuls.  The (B, S, D) -> (B*S, D)
    # leading-dim reshape is a layout no-op for row-major f32 (the per-batch
    # (8, D) sublane tiles are already contiguous), so nothing is copied.
    x2 = x.reshape(B * N, D)
    c2 = ctx.reshape(B * M, D)

    q = (jnp.dot(x2, wq_ref[...], preferred_element_type=jnp.float32)
         + bq_ref[...]).reshape(B, N, Dk)                        # (B, N, Dk)
    k = (jnp.dot(c2, wk_ref[...], preferred_element_type=jnp.float32)
         + bk_ref[...]).reshape(B, M, Dk)                        # (B, M, Dk)
    v = (jnp.dot(c2, wv_ref[...], preferred_element_type=jnp.float32)
         + bv_ref[...]).reshape(B, M, D)                         # (B, M, D)

    # attention_scores = Q @ K^T, contracting last dims (no explicit K^T).
    # NOTE: no 1/sqrt(Dk) scaling, matching the PyTorch module.
    scores = jnp.einsum("bnd,bmd->bnm", q, k,
                        preferred_element_type=jnp.float32)      # (B, N, M)

    # Numerically stable softmax over the last axis; exact divide (only
    # B*N denominators, completely hidden under the existing slack) keeps the
    # externally returned weights exact.
    m = jnp.max(scores, axis=-1, keepdims=True)
    e = jnp.exp(scores - m)
    denom = jnp.sum(e, axis=-1, keepdims=True)
    w = e / denom                                                # (B, N, M)

    attended = jnp.einsum("bnm,bmd->bnd", w, v,
                          preferred_element_type=jnp.float32)    # (B, N, D)

    out_ref[...] = (attended + x.astype(jnp.float32)).astype(out_ref.dtype)
    attn_ref[...] = w.astype(attn_ref.dtype)


def cross_attention(x, context, wq, bq, wk, bk, wv, bv):
    """x: (B, N, D); context: (B, M, D); weights (in_dim, out_dim); biases
    (1, out_dim).  Returns (attended_values + x, attention_weights)."""
    B, N, D = x.shape
    _, M, _ = context.shape

    vmem = pl.BlockSpec(memory_space=pltpu.MemorySpace.VMEM)

    out, attn = pl.pallas_call(
        cross_attention_kernel,
        out_shape=(
            jax.ShapeDtypeStruct((B, N, D), x.dtype),
            jax.ShapeDtypeStruct((B, N, M), jnp.float32),
        ),
        # Grid-less: the whole problem fits comfortably in VMEM on every
        # generation (well under v7x's 64 MiB), so one step, zero per-step
        # grid overhead, five tiny input DMAs + two output DMAs total.
        in_specs=[vmem] * 8,
        out_specs=(vmem, vmem),
    )(x, context, wq, bq, wk, bk, wv, bv)
    return out, attn


def cross_attention_ref(x, context, wq, bq, wk, bk, wv, bv):
    hi = lax.Precision.HIGHEST
    q = jnp.einsum("bnd,dk->bnk", x, wq, precision=hi) + bq
    k = jnp.einsum("bmd,dk->bmk", context, wk, precision=hi) + bk
    v = jnp.einsum("bmd,de->bme", context, wv, precision=hi) + bv
    scores = jnp.einsum("bnd,bmd->bnm", q, k, precision=hi)
    w = jax.nn.softmax(scores, axis=-1)
    out = jnp.einsum("bnm,bmd->bnd", w, v, precision=hi) + x
    return out, w


if __name__ == "__main__":
    key = jax.random.PRNGKey(0)
    B, N, M, D = 2, 8, 8, 32        # batch, num_images (x), context len, feat_dim
    Dk = D // 8

    k1, k2, k3, k4, k5, k6, k7, k8 = jax.random.split(key, 8)
    x = jax.random.normal(k1, (B, N, D), dtype=jnp.float32)
    context = jax.random.normal(k2, (B, M, D), dtype=jnp.float32)

    # Parameters are built once at "init time" in the kernel-friendly layout
    # (W pre-transposed to (in_dim, out_dim), b as (1, out_dim)), so the
    # forward path does no per-call reshapes/concats.
    scale = 1.0 / float(np.sqrt(D))
    wq = jax.random.normal(k3, (D, Dk), dtype=jnp.float32) * scale
    bq = jax.random.normal(k4, (1, Dk), dtype=jnp.float32) * 0.1
    wk = jax.random.normal(k5, (D, Dk), dtype=jnp.float32) * scale
    bk = jax.random.normal(k6, (1, Dk), dtype=jnp.float32) * 0.1
    wv = jax.random.normal(k7, (D, D), dtype=jnp.float32) * scale
    bv = jax.random.normal(k8, (1, D), dtype=jnp.float32) * 0.1

    out, attn = cross_attention(x, context, wq, bq, wk, bk, wv, bv)
    out = jax.block_until_ready(out)
    attn = jax.block_until_ready(attn)

    out_ref, attn_ref = cross_attention_ref(x, context, wq, bq, wk, bk, wv, bv)
    # Exact-divide softmax restored; remaining delta is MXU f32 pass precision.
    np.testing.assert_allclose(np.asarray(out), np.asarray(out_ref),
                               rtol=1e-3, atol=1e-3)
    np.testing.assert_allclose(np.asarray(attn), np.asarray(attn_ref),
                               rtol=1e-3, atol=1e-3)

    print("KERNEL_OK")
</pallas_src>

<mosaic_0001>
module attributes {stable_mosaic.version = 11 : i64} {
  func.func @cross_attention_kernel(%arg0: memref<2x8x32xf32, #tpu.memory_space<vmem>>, %arg1: memref<2x8x32xf32, #tpu.memory_space<vmem>>, %arg2: memref<32x4xf32, #tpu.memory_space<vmem>>, %arg3: memref<1x4xf32, #tpu.memory_space<vmem>>, %arg4: memref<32x4xf32, #tpu.memory_space<vmem>>, %arg5: memref<1x4xf32, #tpu.memory_space<vmem>>, %arg6: memref<32x32xf32, #tpu.memory_space<vmem>>, %arg7: memref<1x32xf32, #tpu.memory_space<vmem>>, %arg8: memref<2x8x32xf32, #tpu.memory_space<vmem>>, %arg9: memref<2x8x8xf32, #tpu.memory_space<vmem>>) attributes {dimension_semantics = [], scalar_prefetch = 0 : i64, scratch_operands = 0 : i64, tpu.core_type = #tpu.core_type<tc>} {
    %c0 = arith.constant 0 : index
    %c0_0 = arith.constant 0 : index
    %c0_1 = arith.constant 0 : index
    %0 = vector.load %arg0[%c0, %c0_0, %c0_1] : memref<2x8x32xf32, #tpu.memory_space<vmem>>, vector<2x8x32xf32>
    %c0_2 = arith.constant 0 : index
    %c0_3 = arith.constant 0 : index
    %c0_4 = arith.constant 0 : index
    %1 = vector.load %arg1[%c0_2, %c0_3, %c0_4] : memref<2x8x32xf32, #tpu.memory_space<vmem>>, vector<2x8x32xf32>
    %2 = vector.shape_cast %0 : vector<2x8x32xf32> to vector<16x32xf32>
    %3 = vector.shape_cast %1 : vector<2x8x32xf32> to vector<16x32xf32>
    %c0_5 = arith.constant 0 : index
    %c0_6 = arith.constant 0 : index
    %4 = vector.load %arg2[%c0_5, %c0_6] : memref<32x4xf32, #tpu.memory_space<vmem>>, vector<32x4xf32>
    %cst = arith.constant dense<0.000000e+00> : vector<16x4xf32>
    %5 = tpu.matmul %2, %4, %cst {dimension_numbers = #tpu.dot_dimension_numbers<[1], [0], [0], [1], [0, 0, 1, 1], [], []>} : vector<16x32xf32>, vector<32x4xf32>, vector<16x4xf32> -> vector<16x4xf32>
    %c0_7 = arith.constant 0 : index
    %c0_8 = arith.constant 0 : index
    %6 = vector.load %arg3[%c0_7, %c0_8] : memref<1x4xf32, #tpu.memory_space<vmem>>, vector<1x4xf32>
    %7 = vector.broadcast %6 : vector<1x4xf32> to vector<16x4xf32>
    %8 = arith.addf %5, %7 : vector<16x4xf32>
    %9 = vector.shape_cast %8 : vector<16x4xf32> to vector<2x8x4xf32>
    %c0_9 = arith.constant 0 : index
    %c0_10 = arith.constant 0 : index
    %10 = vector.load %arg4[%c0_9, %c0_10] : memref<32x4xf32, #tpu.memory_space<vmem>>, vector<32x4xf32>
    %cst_11 = arith.constant dense<0.000000e+00> : vector<16x4xf32>
    %11 = tpu.matmul %3, %10, %cst_11 {dimension_numbers = #tpu.dot_dimension_numbers<[1], [0], [0], [1], [0, 0, 1, 1], [], []>} : vector<16x32xf32>, vector<32x4xf32>, vector<16x4xf32> -> vector<16x4xf32>
    %c0_12 = arith.constant 0 : index
    %c0_13 = arith.constant 0 : index
    %12 = vector.load %arg5[%c0_12, %c0_13] : memref<1x4xf32, #tpu.memory_space<vmem>>, vector<1x4xf32>
    %13 = vector.broadcast %12 : vector<1x4xf32> to vector<16x4xf32>
    %14 = arith.addf %11, %13 : vector<16x4xf32>
    %15 = vector.shape_cast %14 : vector<16x4xf32> to vector<2x8x4xf32>
    %c0_14 = arith.constant 0 : index
    %c0_15 = arith.constant 0 : index
    %16 = vector.load %arg6[%c0_14, %c0_15] : memref<32x32xf32, #tpu.memory_space<vmem>>, vector<32x32xf32>
    %cst_16 = arith.constant dense<0.000000e+00> : vector<16x32xf32>
    %17 = tpu.matmul %3, %16, %cst_16 {dimension_numbers = #tpu.dot_dimension_numbers<[1], [0], [0], [1], [0, 0, 1, 1], [], []>} : vector<16x32xf32>, vector<32x32xf32>, vector<16x32xf32> -> vector<16x32xf32>
    %c0_17 = arith.constant 0 : index
    %c0_18 = arith.constant 0 : index
    %18 = vector.load %arg7[%c0_17, %c0_18] : memref<1x32xf32, #tpu.memory_space<vmem>>, vector<1x32xf32>
    %19 = vector.broadcast %18 : vector<1x32xf32> to vector<16x32xf32>
    %20 = arith.addf %17, %19 : vector<16x32xf32>
    %21 = vector.shape_cast %20 : vector<16x32xf32> to vector<2x8x32xf32>
    "tpu.trace_start"() <{level = 10 : i32, message = "bnd,bmd->bnm"}> : () -> ()
    %cst_19 = arith.constant dense<0.000000e+00> : vector<2x8x8xf32>
    %22 = tpu.matmul %9, %15, %cst_19 {dimension_numbers = #tpu.dot_dimension_numbers<[2], [2], [1], [1], [0, 0, 0, 1, 1, 1], [0], [0]>} : vector<2x8x4xf32>, vector<2x8x4xf32>, vector<2x8x8xf32> -> vector<2x8x8xf32>
    "tpu.trace_stop"() : () -> ()
    %cst_20 = arith.constant dense<0xFF800000> : vector<2x8xf32>
    %23 = vector.multi_reduction <maximumf>, %22, %cst_20 [2] : vector<2x8x8xf32> to vector<2x8xf32>
    %24 = vector.shape_cast %23 : vector<2x8xf32> to vector<2x8x1xf32>
    %25 = vector.broadcast %24 : vector<2x8x1xf32> to vector<2x8x8xf32>
    %26 = arith.subf %22, %25 : vector<2x8x8xf32>
    %27 = math.exp %26 : vector<2x8x8xf32>
    %cst_21 = arith.constant dense<0.000000e+00> : vector<2x8xf32>
    %28 = vector.multi_reduction <add>, %27, %cst_21 [2] : vector<2x8x8xf32> to vector<2x8xf32>
    %29 = vector.shape_cast %28 : vector<2x8xf32> to vector<2x8x1xf32>
    %30 = vector.broadcast %29 : vector<2x8x1xf32> to vector<2x8x8xf32>
    %31 = arith.divf %27, %30 : vector<2x8x8xf32>
    "tpu.trace_start"() <{level = 10 : i32, message = "bnm,bmd->bnd"}> : () -> ()
    %cst_22 = arith.constant dense<0.000000e+00> : vector<2x8x32xf32>
    %32 = tpu.matmul %31, %21, %cst_22 {dimension_numbers = #tpu.dot_dimension_numbers<[2], [1], [1], [2], [0, 0, 0, 1, 1, 2], [0], [0]>} : vector<2x8x8xf32>, vector<2x8x32xf32>, vector<2x8x32xf32> -> vector<2x8x32xf32>
    "tpu.trace_stop"() : () -> ()
    %33 = arith.addf %32, %0 : vector<2x8x32xf32>
    %c0_23 = arith.constant 0 : index
    %c0_24 = arith.constant 0 : index
    %c0_25 = arith.constant 0 : index
    %34 = vector.load %arg8[%c0_23, %c0_24, %c0_25] : memref<2x8x32xf32, #tpu.memory_space<vmem>>, vector<2x8x32xf32>
    tpu.vector_store %arg8[%c0_23, %c0_24, %c0_25], %33 {strides = array<i32>} : memref<2x8x32xf32, #tpu.memory_space<vmem>>, vector<2x8x32xf32>,
    %c0_26 = arith.constant 0 : index
    %c0_27 = arith.constant 0 : index
    %c0_28 = arith.constant 0 : index
    %35 = vector.load %arg9[%c0_26, %c0_27, %c0_28] : memref<2x8x8xf32, #tpu.memory_space<vmem>>, vector<2x8x8xf32>
    tpu.vector_store %arg9[%c0_26, %c0_27, %c0_28], %31 {strides = array<i32>} : memref<2x8x8xf32, #tpu.memory_space<vmem>>, vector<2x8x8xf32>,
    return
  }
}

</mosaic_0001>

<llo_original>
// kernel: tpu_custom_call.1
$region0: #{tpu_custom_call.1}
  #allocation0 [shape = 'u32[]', space=smem, size = 0x4, offset = 0x4, fixed_abs, tag = 'smem constant byte address 0x4 - core index']
  #allocation1 [shape = 'u32[144,128]{1,0:T(1,128)}', space=vmem, size = 0x12000, scoped, tag = 'internal scratch']
  %s0 = inlined_call_operand.vmem [shape: f32[2,8,32], index: 0, kind: input, shape index: {}]
  %s1 = inlined_call_operand.vmem [shape: f32[2,8,32], index: 1, kind: input, shape index: {}]
  %s2 = inlined_call_operand.vmem [shape: f32[32,4], index: 2, kind: input, shape index: {}]
  %s3 = inlined_call_operand.vmem [shape: f32[1,4], index: 3, kind: input, shape index: {}]
  %s4 = inlined_call_operand.vmem [shape: f32[32,4], index: 4, kind: input, shape index: {}]
  %s5 = inlined_call_operand.vmem [shape: f32[1,4], index: 5, kind: input, shape index: {}]
  %s6 = inlined_call_operand.vmem [shape: f32[32,32], index: 6, kind: input, shape index: {}]
  %s7 = inlined_call_operand.vmem [shape: f32[1,32], index: 7, kind: input, shape index: {}]
  %s8 = inlined_call_operand.hbm [shape: f32[2,8,32], index: 8, kind: output, shape index: {0}]
  %s9 = inlined_call_operand.hbm [shape: f32[2,8,8], index: 9, kind: output, shape index: {1}]
  %10 = xla_tuple %s8, %s9
  %s11 = sld [smem:[#allocation0]]
  $region50: #{tpu_custom_call.1} parent=0
    _
  %s13 = ssub.s32 1, %s11
  %s14 = scalar_select 0, %s13, %s11
  $region1: #{tpu_custom_call.1} parent=0
    #allocation2 [shape = 'u8[8192]{0}', space=vmem, size = 0x2000, scoped, tag = 'output window, operand 0, single buffered']
    #allocation3 [shape = 's32[1]{0}', space=sflag, size = 0x4, scoped, tag = 'scoped memory for tpu_custom_call.1']
    #allocation4 [shape = 'u8[8192]{0}', space=vmem, size = 0x2000, scoped, tag = 'output window, operand 1, single buffered']
    #allocation5 [shape = 's32[1]{0}', space=sflag, size = 0x4, scoped, tag = 'scoped memory for tpu_custom_call.1']
    %15 = vsyncpa [#allocation3], 0
    %16 = vsyncpa [#allocation5], 0
    // Predicated region
    $region2: #{tpu_custom_call.1} parent=1 // pred_check
      _
    $region3: #{tpu_custom_call.1} parent=1 // pred_check_branch
      %18 = sbr.rel (0) target = $region5
    $region4: #{tpu_custom_call.1} parent=1 // pred_region
      _
    $region5: #{tpu_custom_call.1} parent=1 // pred_fallthru
      _
    // Predicated region
    $region6: #{tpu_custom_call.1} parent=1 // pred_check
      _
    $region7: #{tpu_custom_call.1} parent=1 // pred_check_branch
      %20 = sbr.rel (0) target = $region9
    $region8: #{tpu_custom_call.1} parent=1 // pred_region
      _
    $region9: #{tpu_custom_call.1} parent=1 // pred_fallthru
      _
    // Predicated region
    $region10: #{tpu_custom_call.1} parent=1 // pred_check
      _
    $region11: #{tpu_custom_call.1} parent=1 // pred_check_branch
      %22 = sbr.rel (0) target = $region13
    $region12: #{tpu_custom_call.1} parent=1 // pred_region
      _
    $region13: #{tpu_custom_call.1} parent=1 // pred_fallthru
      _
    // Predicated region
    $region14: #{tpu_custom_call.1} parent=1 // pred_check
      _
    $region15: #{tpu_custom_call.1} parent=1 // pred_check_branch
      %24 = sbr.rel (0) target = $region17
    $region16: #{tpu_custom_call.1} parent=1 // pred_region
      _
    $region17: #{tpu_custom_call.1} parent=1 // pred_fallthru
      _
    // Predicated region
    $region18: #{tpu_custom_call.1} parent=1 // pred_check
      _
    $region19: #{tpu_custom_call.1} parent=1 // pred_check_branch
      %26 = sbr.rel (0) target = $region21
    $region20: #{tpu_custom_call.1} parent=1 // pred_region
      _
    $region21: #{tpu_custom_call.1} parent=1 // pred_fallthru
      _
    // Predicated region
    $region22: #{tpu_custom_call.1} parent=1 // pred_check
      _
    $region23: #{tpu_custom_call.1} parent=1 // pred_check_branch
      %28 = sbr.rel (0) target = $region25
    $region24: #{tpu_custom_call.1} parent=1 // pred_region
      _
    $region25: #{tpu_custom_call.1} parent=1 // pred_fallthru
      _
    // Predicated region
    $region26: #{tpu_custom_call.1} parent=1 // pred_check
      _
    $region27: #{tpu_custom_call.1} parent=1 // pred_check_branch
      %30 = sbr.rel (0) target = $region29
    $region28: #{tpu_custom_call.1} parent=1 // pred_region
      _
    $region29: #{tpu_custom_call.1} parent=1 // pred_fallthru
      _
    // Predicated region
    $region30: #{tpu_custom_call.1} parent=1 // pred_check
      _
    $region31: #{tpu_custom_call.1} parent=1 // pred_check_branch
      %32 = sbr.rel (0) target = $region33
    $region32: #{tpu_custom_call.1} parent=1 // pred_region
      _
    $region33: #{tpu_custom_call.1} parent=1 // pred_fallthru
      _
    %v33 = vld [vmem:[%s0] sm:$0xff]
    %v34 = vld [vmem:[%s0 + $0x8] sm:$0xff]
    %v35 = vld [vmem:[%s1] sm:$0xff]
    %v36 = vld [vmem:[%s1 + $0x8] sm:$0xff]
    %v37 = vld [vmem:[%s2] sm:$0xff]
    %v38 = vld [vmem:[%s2 + $0x8] sm:$0xff]
    %v39 = vld [vmem:[%s2 + $0x10] sm:$0xff]
    %v40 = vld [vmem:[%s2 + $0x18] sm:$0xff]
    %v41 = vld [vmem:[%s3] sm:$0x1]
    %v43 = vlaneseq
    %v44 = vshrl.u32 %v43, 7
    %v45 = vsub.s32 0, %v44
    %v46 = vrot.slane %v41, %v45
    %vm48 = vcmask 261120
    %v50 = vsel %vm48, %v33, 0
    %v53 = vsel %vm48, %v34, 0
    %55 = vmatprep.subr.mxu0 0.0
    %56 = vmatpush1.msra.mxu0 0.0
    %57 = vmatprep.subr.mxu0 0.0
    %58 = vmatpush1.msra.mxu0 0.0
    %59 = vmatprep.subr.mxu0 0.0
    %60 = vmatpush1.msra.mxu0 0.0
    %61 = vmatprep.subr.mxu0 0.0
    %62 = vmatpush1.msra.mxu0 0.0
    %63 = vmatprep.subr.mxu0 0.0
    %64 = vmatpush1.msra.mxu0 0.0
    %65 = vmatprep.subr.mxu0 0.0
    %66 = vmatpush1.msra.mxu0 0.0
    %67 = vmatprep.subr.mxu0 0.0
    %68 = vmatpush1.msra.mxu0 0.0
    %69 = vmatprep.subr.mxu0 0.0
    %70 = vmatpush1.msra.mxu0 0.0
    %71 = vmatprep.subr.mxu0 0.0
    %72 = vmatpush1.msra.mxu0 0.0
    %73 = vmatprep.subr.mxu0 0.0
    %74 = vmatpush1.msra.mxu0 0.0
    %75 = vmatprep.subr.mxu0 0.0
    %76 = vmatpush1.msra.mxu0 0.0
    %77 = vmatprep.subr.mxu0 0.0
    %78 = vmatpush1.msra.mxu0 0.0
    %79 = vmatprep.subr.mxu0 0.0
    %80 = vmatpush1.msra.mxu0 %v40
    %81 = vmatprep.subr.mxu0 0.0
    %82 = vmatpush1.msra.mxu0 %v39
    %83 = vmatprep.subr.mxu0 0.0
    %84 = vmatpush1.msra.mxu0 %v38
    %85 = vmatprep.subr.mxu0 0.0
    %86 = vmatpush1.msra.mxu0 %v37
    %87 = vmatprep.subr.mxu0 0.0
    %88 = vmatpush2.msra.mxu0 0.0
    %89 = vmatprep.subr.mxu0 0.0
    %90 = vmatpush2.msra.mxu0 0.0
    %91 = vmatprep.subr.mxu0 0.0
    %92 = vmatpush2.msra.mxu0 0.0
    %93 = vmatprep.subr.mxu0 0.0
    %94 = vmatpush2.msra.mxu0 0.0
    %95 = vmatprep.subr.mxu0 0.0
    %96 = vmatpush2.msra.mxu0 0.0
    %97 = vmatprep.subr.mxu0 0.0
    %98 = vmatpush2.msra.mxu0 0.0
    %99 = vmatprep.subr.mxu0 0.0
    %100 = vmatpush2.msra.mxu0 0.0
    %101 = vmatprep.subr.mxu0 0.0
    %102 = vmatpush2.msra.mxu0 0.0
    %103 = vmatprep.subr.mxu0 0.0
    %104 = vmatpush2.msra.mxu0 0.0
    %105 = vmatprep.subr.mxu0 0.0
    %106 = vmatpush2.msra.mxu0 0.0
    %107 = vmatprep.subr.mxu0 0.0
    %108 = vmatpush2.msra.mxu0 0.0
    %109 = vmatprep.subr.mxu0 0.0
    %110 = vmatpush2.msra.mxu0 0.0
    %111 = vmatprep.subr.mxu0 0.0
    %112 = vmatpush2.msra.mxu0 0.0
    %113 = vmatprep.subr.mxu0 0.0
    %114 = vmatpush2.msra.mxu0 0.0
    %115 = vmatprep.subr.mxu0 0.0
    %116 = vmatpush2.msra.mxu0 0.0
    %117 = vmatprep.subr.mxu0 0.0
    %118 = vmatpush2.msra.mxu0 0.0
    %119 = vmatprep.mubr.f32.mxu0 0.0
    %120 = vmatmul.mubr.f32.gmra.mxu0 %v50
    %v121 = vpop.f32.mrf.mxu0
    %v122 = vadd.f32 %v46, %v121
    %v123 = vpop.f32.mrf.mxu0
    %124 = vmatprep.mubr.f32.mxu0 0.0
    %125 = vmatmul.mubr.f32.gmra.mxu0 %v53
    %v126 = vpop.f32.mrf.mxu0
    %v127 = vadd.f32 %v46, %v126
    %v128 = vpop.f32.mrf.mxu0
    %129 = vdwg.mxu0
    %v130 = vld [vmem:[%s4] sm:$0xff]
    %v131 = vld [vmem:[%s4 + $0x8] sm:$0xff]
    %v132 = vld [vmem:[%s4 + $0x10] sm:$0xff]
    %v133 = vld [vmem:[%s4 + $0x18] sm:$0xff]
    %v134 = vld [vmem:[%s5] sm:$0x1]
    %v136 = vlaneseq
    %v137 = vshrl.u32 %v136, 7
    %v138 = vsub.s32 0, %v137
    %v139 = vrot.slane %v134, %v138
    %v142 = vsel %vm48, %v35, 0
    %v145 = vsel %vm48, %v36, 0
    %147 = vmatprep.subr.mxu0 0.0
    %148 = vmatpush1.msra.mxu0 0.0
    %149 = vmatprep.subr.mxu0 0.0
    %150 = vmatpush1.msra.mxu0 0.0
    %151 = vmatprep.subr.mxu0 0.0
    %152 = vmatpush1.msra.mxu0 0.0
    %153 = vmatprep.subr.mxu0 0.0
    %154 = vmatpush1.msra.mxu0 0.0
    %155 = vmatprep.subr.mxu0 0.0
    %156 = vmatpush1.msra.mxu0 0.0
    %157 = vmatprep.subr.mxu0 0.0
    %158 = vmatpush1.msra.mxu0 0.0
    %159 = vmatprep.subr.mxu0 0.0
    %160 = vmatpush1.msra.mxu0 0.0
    %161 = vmatprep.subr.mxu0 0.0
    %162 = vmatpush1.msra.mxu0 0.0
    %163 = vmatprep.subr.mxu0 0.0
    %164 = vmatpush1.msra.mxu0 0.0
    %165 = vmatprep.subr.mxu0 0.0
    %166 = vmatpush1.msra.mxu0 0.0
    %167 = vmatprep.subr.mxu0 0.0
    %168 = vmatpush1.msra.mxu0 0.0
    %169 = vmatprep.subr.mxu0 0.0
    %170 = vmatpush1.msra.mxu0 0.0
    %171 = vmatprep.subr.mxu0 0.0
    %172 = vmatpush1.msra.mxu0 %v133
    %173 = vmatprep.subr.mxu0 0.0
    %174 = vmatpush1.msra.mxu0 %v132
    %175 = vmatprep.subr.mxu0 0.0
    %176 = vmatpush1.msra.mxu0 %v131
    %177 = vmatprep.subr.mxu0 0.0
    %178 = vmatpush1.msra.mxu0 %v130
    %179 = vmatprep.subr.mxu0 0.0
    %180 = vmatpush2.msra.mxu0 0.0
    %181 = vmatprep.subr.mxu0 0.0
    %182 = vmatpush2.msra.mxu0 0.0
    %183 = vmatprep.subr.mxu0 0.0
    %184 = vmatpush2.msra.mxu0 0.0
    %185 = vmatprep.subr.mxu0 0.0
    %186 = vmatpush2.msra.mxu0 0.0
    %187 = vmatprep.subr.mxu0 0.0
    %188 = vmatpush2.msra.mxu0 0.0
    %189 = vmatprep.subr.mxu0 0.0
    %190 = vmatpush2.msra.mxu0 0.0
    %191 = vmatprep.subr.mxu0 0.0
    %192 = vmatpush2.msra.mxu0 0.0
    %193 = vmatprep.subr.mxu0 0.0
    %194 = vmatpush2.msra.mxu0 0.0
    %195 = vmatprep.subr.mxu0 0.0
    %196 = vmatpush2.msra.mxu0 0.0
    %197 = vmatprep.subr.mxu0 0.0
    %198 = vmatpush2.msra.mxu0 0.0
    %199 = vmatprep.subr.mxu0 0.0
    %200 = vmatpush2.msra.mxu0 0.0
    %201 = vmatprep.subr.mxu0 0.0
    %202 = vmatpush2.msra.mxu0 0.0
    %203 = vmatprep.subr.mxu0 0.0
    %204 = vmatpush2.msra.mxu0 0.0
    %205 = vmatprep.subr.mxu0 0.0
    %206 = vmatpush2.msra.mxu0 0.0
    %207 = vmatprep.subr.mxu0 0.0
    %208 = vmatpush2.msra.mxu0 0.0
    %209 = vmatprep.subr.mxu0 0.0
    %210 = vmatpush2.msra.mxu0 0.0
    %211 = vmatprep.mubr.f32.mxu0 0.0
    %212 = vmatmul.mubr.f32.gmra.mxu0 %v142
    %v213 = vpop.f32.mrf.mxu0
    %v214 = vadd.f32 %v139, %v213
    %v215 = vpop.f32.mrf.mxu0
    %216 = vmatprep.mubr.f32.mxu0 0.0
    %217 = vmatmul.mubr.f32.gmra.mxu0 %v145
    %v218 = vpop.f32.mrf.mxu0
    %v219 = vadd.f32 %v139, %v218
    %v220 = vpop.f32.mrf.mxu0
    %221 = vdwg.mxu0
    %v222 = vld [vmem:[%s6] sm:$0xff]
    %v223 = vld [vmem:[%s6 + $0x8] sm:$0xff]
    %v224 = vld [vmem:[%s6 + $0x10] sm:$0xff]
    %v225 = vld [vmem:[%s6 + $0x18] sm:$0xff]
    %v226 = vld [vmem:[%s7] sm:$0x1]
    %v228 = vlaneseq
    %v229 = vshrl.u32 %v228, 7
    %v230 = vsub.s32 0, %v229
    %v231 = vrot.slane %v226, %v230
    %233 = vmatprep.subr.mxu0 0.0
    %234 = vmatpush1.msra.mxu0 0.0
    %235 = vmatprep.subr.mxu0 0.0
    %236 = vmatpush1.msra.mxu0 0.0
    %237 = vmatprep.subr.mxu0 0.0
    %238 = vmatpush1.msra.mxu0 0.0
    %239 = vmatprep.subr.mxu0 0.0
    %240 = vmatpush1.msra.mxu0 0.0
    %241 = vmatprep.subr.mxu0 0.0
    %242 = vmatpush1.msra.mxu0 0.0
    %243 = vmatprep.subr.mxu0 0.0
    %244 = vmatpush1.msra.mxu0 0.0
    %245 = vmatprep.subr.mxu0 0.0
    %246 = vmatpush1.msra.mxu0 0.0
    %247 = vmatprep.subr.mxu0 0.0
    %248 = vmatpush1.msra.mxu0 0.0
    %249 = vmatprep.subr.mxu0 0.0
    %250 = vmatpush1.msra.mxu0 0.0
    %251 = vmatprep.subr.mxu0 0.0
    %252 = vmatpush1.msra.mxu0 0.0
    %253 = vmatprep.subr.mxu0 0.0
    %254 = vmatpush1.msra.mxu0 0.0
    %255 = vmatprep.subr.mxu0 0.0
    %256 = vmatpush1.msra.mxu0 0.0
    %257 = vmatprep.subr.mxu0 0.0
    %258 = vmatpush1.msra.mxu0 %v225
    %259 = vmatprep.subr.mxu0 0.0
    %260 = vmatpush1.msra.mxu0 %v224
    %261 = vmatprep.subr.mxu0 0.0
    %262 = vmatpush1.msra.mxu0 %v223
    %263 = vmatprep.subr.mxu0 0.0
    %264 = vmatpush1.msra.mxu0 %v222
    %265 = vmatprep.subr.mxu0 0.0
    %266 = vmatpush2.msra.mxu0 0.0
    %267 = vmatprep.subr.mxu0 0.0
    %268 = vmatpush2.msra.mxu0 0.0
    %269 = vmatprep.subr.mxu0 0.0
    %270 = vmatpush2.msra.mxu0 0.0
    %271 = vmatprep.subr.mxu0 0.0
    %272 = vmatpush2.msra.mxu0 0.0
    %273 = vmatprep.subr.mxu0 0.0
    %274 = vmatpush2.msra.mxu0 0.0
    %275 = vmatprep.subr.mxu0 0.0
    %276 = vmatpush2.msra.mxu0 0.0
    %277 = vmatprep.subr.mxu0 0.0
    %278 = vmatpush2.msra.mxu0 0.0
    %279 = vmatprep.subr.mxu0 0.0
    %280 = vmatpush2.msra.mxu0 0.0
    %281 = vmatprep.subr.mxu0 0.0
    %282 = vmatpush2.msra.mxu0 0.0
    %283 = vmatprep.subr.mxu0 0.0
    %284 = vmatpush2.msra.mxu0 0.0
    %285 = vmatprep.subr.mxu0 0.0
    %286 = vmatpush2.msra.mxu0 0.0
    %287 = vmatprep.subr.mxu0 0.0
    %288 = vmatpush2.msra.mxu0 0.0
    %289 = vmatprep.subr.mxu0 0.0
    %290 = vmatpush2.msra.mxu0 0.0
    %291 = vmatprep.subr.mxu0 0.0
    %292 = vmatpush2.msra.mxu0 0.0
    %293 = vmatprep.subr.mxu0 0.0
    %294 = vmatpush2.msra.mxu0 0.0
    %295 = vmatprep.subr.mxu0 0.0
    %296 = vmatpush2.msra.mxu0 0.0
    %297 = vmatprep.mubr.f32.mxu0 0.0
    %298 = vmatmul.mubr.f32.gmra.mxu0 %v142
    %v299 = vpop.f32.mrf.mxu0
    %v300 = vadd.f32 %v231, %v299
    %v301 = vpop.f32.mrf.mxu0
    %302 = vmatprep.mubr.f32.mxu0 0.0
    %303 = vmatmul.mubr.f32.gmra.mxu0 %v145
    %v304 = vpop.f32.mrf.mxu0
    %v305 = vadd.f32 %v231, %v304
    %v306 = vpop.f32.mrf.mxu0
    %307 = vdwg.mxu0
    %vm308 = vcmask 31744
    %v310 = vsel %vm308, %v122, 0
    %v313 = vsel %vm308, %v214, 0
    %315 = vmatprep.subr.mxu0 0.0
    %316 = vmatpush1.xpose.msra.mxu0 0.0
    %317 = vmatprep.subr.mxu0 0.0
    %318 = vmatpush1.xpose.msra.mxu0 0.0
    %319 = vmatprep.subr.mxu0 0.0
    %320 = vmatpush1.xpose.msra.mxu0 0.0
    %321 = vmatprep.subr.mxu0 0.0
    %322 = vmatpush1.xpose.msra.mxu0 0.0
    %323 = vmatprep.subr.mxu0 0.0
    %324 = vmatpush1.xpose.msra.mxu0 0.0
    %325 = vmatprep.subr.mxu0 0.0
    %326 = vmatpush1.xpose.msra.mxu0 0.0
    %327 = vmatprep.subr.mxu0 0.0
    %328 = vmatpush1.xpose.msra.mxu0 0.0
    %329 = vmatprep.subr.mxu0 0.0
    %330 = vmatpush1.xpose.msra.mxu0 0.0
    %331 = vmatprep.subr.mxu0 0.0
    %332 = vmatpush1.xpose.msra.mxu0 0.0
    %333 = vmatprep.subr.mxu0 0.0
    %334 = vmatpush1.xpose.msra.mxu0 0.0
    %335 = vmatprep.subr.mxu0 0.0
    %336 = vmatpush1.xpose.msra.mxu0 0.0
    %337 = vmatprep.subr.mxu0 0.0
    %338 = vmatpush1.xpose.msra.mxu0 0.0
    %339 = vmatprep.subr.mxu0 0.0
    %340 = vmatpush1.xpose.msra.mxu0 0.0
    %341 = vmatprep.subr.mxu0 0.0
    %342 = vmatpush1.xpose.msra.mxu0 0.0
    %343 = vmatprep.subr.mxu0 0.0
    %344 = vmatpush1.xpose.msra.mxu0 0.0
    %345 = vmatprep.subr.mxu0 0.0
    %346 = vmatpush1.xpose.msra.mxu0 %v313
    %347 = vmatprep.subr.mxu0 0.0
    %348 = vmatpush2.xpose.msra.mxu0 0.0
    %349 = vmatprep.subr.mxu0 0.0
    %350 = vmatpush2.xpose.msra.mxu0 0.0
    %351 = vmatprep.subr.mxu0 0.0
    %352 = vmatpush2.xpose.msra.mxu0 0.0
    %353 = vmatprep.subr.mxu0 0.0
    %354 = vmatpush2.xpose.msra.mxu0 0.0
    %355 = vmatprep.subr.mxu0 0.0
    %356 = vmatpush2.xpose.msra.mxu0 0.0
    %357 = vmatprep.subr.mxu0 0.0
    %358 = vmatpush2.xpose.msra.mxu0 0.0
    %359 = vmatprep.subr.mxu0 0.0
    %360 = vmatpush2.xpose.msra.mxu0 0.0
    %361 = vmatprep.subr.mxu0 0.0
    %362 = vmatpush2.xpose.msra.mxu0 0.0
    %363 = vmatprep.subr.mxu0 0.0
    %364 = vmatpush2.xpose.msra.mxu0 0.0
    %365 = vmatprep.subr.mxu0 0.0
    %366 = vmatpush2.xpose.msra.mxu0 0.0
    %367 = vmatprep.subr.mxu0 0.0
    %368 = vmatpush2.xpose.msra.mxu0 0.0
    %369 = vmatprep.subr.mxu0 0.0
    %370 = vmatpush2.xpose.msra.mxu0 0.0
    %371 = vmatprep.subr.mxu0 0.0
    %372 = vmatpush2.xpose.msra.mxu0 0.0
    %373 = vmatprep.subr.mxu0 0.0
    %374 = vmatpush2.xpose.msra.mxu0 0.0
    %375 = vmatprep.subr.mxu0 0.0
    %376 = vmatpush2.xpose.msra.mxu0 0.0
    %377 = vmatprep.subr.mxu0 0.0
    %378 = vmatpush2.xpose.msra.mxu0 0.0
    %379 = vmatprep.mubr.f32.mxu0 0.0
    %380 = vmatmul.mubr.f32.gmra.mxu0 %v310
    %v381 = vpop.f32.mrf.mxu0
    %v382 = vadd.f32 0.0, %v381
    %v383 = vpop.f32.mrf.mxu0
    %384 = vdwg.mxu0
    %v386 = vsel %vm308, %v127, 0
    %v389 = vsel %vm308, %v219, 0
    %391 = vmatprep.subr.mxu0 0.0
    %392 = vmatpush1.xpose.msra.mxu0 0.0
    %393 = vmatprep.subr.mxu0 0.0
    %394 = vmatpush1.xpose.msra.mxu0 0.0
    %395 = vmatprep.subr.mxu0 0.0
    %396 = vmatpush1.xpose.msra.mxu0 0.0
    %397 = vmatprep.subr.mxu0 0.0
    %398 = vmatpush1.xpose.msra.mxu0 0.0
    %399 = vmatprep.subr.mxu0 0.0
    %400 = vmatpush1.xpose.msra.mxu0 0.0
    %401 = vmatprep.subr.mxu0 0.0
    %402 = vmatpush1.xpose.msra.mxu0 0.0
    %403 = vmatprep.subr.mxu0 0.0
    %404 = vmatpush1.xpose.msra.mxu0 0.0
    %405 = vmatprep.subr.mxu0 0.0
    %406 = vmatpush1.xpose.msra.mxu0 0.0
    %407 = vmatprep.subr.mxu0 0.0
    %408 = vmatpush1.xpose.msra.mxu0 0.0
    %409 = vmatprep.subr.mxu0 0.0
    %410 = vmatpush1.xpose.msra.mxu0 0.0
    %411 = vmatprep.subr.mxu0 0.0
    %412 = vmatpush1.xpose.msra.mxu0 0.0
    %413 = vmatprep.subr.mxu0 0.0
    %414 = vmatpush1.xpose.msra.mxu0 0.0
    %415 = vmatprep.subr.mxu0 0.0
    %416 = vmatpush1.xpose.msra.mxu0 0.0
    %417 = vmatprep.subr.mxu0 0.0
    %418 = vmatpush1.xpose.msra.mxu0 0.0
    %419 = vmatprep.subr.mxu0 0.0
    %420 = vmatpush1.xpose.msra.mxu0 0.0
    %421 = vmatprep.subr.mxu0 0.0
    %422 = vmatpush1.xpose.msra.mxu0 %v389
    %423 = vmatprep.subr.mxu0 0.0
    %424 = vmatpush2.xpose.msra.mxu0 0.0
    %425 = vmatprep.subr.mxu0 0.0
    %426 = vmatpush2.xpose.msra.mxu0 0.0
    %427 = vmatprep.subr.mxu0 0.0
    %428 = vmatpush2.xpose.msra.mxu0 0.0
    %429 = vmatprep.subr.mxu0 0.0
    %430 = vmatpush2.xpose.msra.mxu0 0.0
    %431 = vmatprep.subr.mxu0 0.0
    %432 = vmatpush2.xpose.msra.mxu0 0.0
    %433 = vmatprep.subr.mxu0 0.0
    %434 = vmatpush2.xpose.msra.mxu0 0.0
    %435 = vmatprep.subr.mxu0 0.0
    %436 = vmatpush2.xpose.msra.mxu0 0.0
    %437 = vmatprep.subr.mxu0 0.0
    %438 = vmatpush2.xpose.msra.mxu0 0.0
    %439 = vmatprep.subr.mxu0 0.0
    %440 = vmatpush2.xpose.msra.mxu0 0.0
    %441 = vmatprep.subr.mxu0 0.0
    %442 = vmatpush2.xpose.msra.mxu0 0.0
    %443 = vmatprep.subr.mxu0 0.0
    %444 = vmatpush2.xpose.msra.mxu0 0.0
    %445 = vmatprep.subr.mxu0 0.0
    %446 = vmatpush2.xpose.msra.mxu0 0.0
    %447 = vmatprep.subr.mxu0 0.0
    %448 = vmatpush2.xpose.msra.mxu0 0.0
    %449 = vmatprep.subr.mxu0 0.0
    %450 = vmatpush2.xpose.msra.mxu0 0.0
    %451 = vmatprep.subr.mxu0 0.0
    %452 = vmatpush2.xpose.msra.mxu0 0.0
    %453 = vmatprep.subr.mxu0 0.0
    %454 = vmatpush2.xpose.msra.mxu0 0.0
    %455 = vmatprep.mubr.f32.mxu0 0.0
    %456 = vmatmul.mubr.f32.gmra.mxu0 %v386
    %v457 = vpop.f32.mrf.mxu0
    %v458 = vadd.f32 0.0, %v457
    %v459 = vpop.f32.mrf.mxu0
    %460 = vdwg.mxu0
    %vm461 = vcmask 64512
    %v462 = vsel %vm461, %v382, -inf
    %463 = vmax.xlane.f32.xlu0 %v462
    %v464 = vpop.xlane.xlu0 %463
    %v465 = vsel %vm461, %v458, -inf
    %466 = vmax.xlane.f32.xlu0 %v465
    %v467 = vpop.xlane.xlu0 %466
    %v468 = vsub.f32 %v382, %v464
    %v469 = vsub.f32 %v458, %v467
    %v470 = vmul.f32 %v468, 1.442695
    %v471 = vpow.pop %v470
    %v472 = vmul.f32 %v469, 1.442695
    %v473 = vpow.pop %v472
    %v474 = vsel %vm461, %v471, 0.0
    %475 = vadd.xlane.f32.xlu0 %v474
    %v476 = vpop.xlane.xlu0 %475
    %v477 = vsel %vm461, %v473, 0.0
    %478 = vadd.xlane.f32.xlu0 %v477
    %v479 = vpop.xlane.xlu0 %478
    %v480 = vrcp.pop %v476
    %v481 = vmul.f32 %v471, %v480
    %v482 = vrcp.pop %v479
    %v483 = vmul.f32 %v473, %v482
    %v485 = vsel %vm461, %v481, 0
    %487 = vmatprep.subr.mxu0 0.0
    %488 = vmatpush1.msra.mxu0 0.0
    %489 = vmatprep.subr.mxu0 0.0
    %490 = vmatpush1.msra.mxu0 0.0
    %491 = vmatprep.subr.mxu0 0.0
    %492 = vmatpush1.msra.mxu0 0.0
    %493 = vmatprep.subr.mxu0 0.0
    %494 = vmatpush1.msra.mxu0 0.0
    %495 = vmatprep.subr.mxu0 0.0
    %496 = vmatpush1.msra.mxu0 0.0
    %497 = vmatprep.subr.mxu0 0.0
    %498 = vmatpush1.msra.mxu0 0.0
    %499 = vmatprep.subr.mxu0 0.0
    %500 = vmatpush1.msra.mxu0 0.0
    %501 = vmatprep.subr.mxu0 0.0
    %502 = vmatpush1.msra.mxu0 0.0
    %503 = vmatprep.subr.mxu0 0.0
    %504 = vmatpush1.msra.mxu0 0.0
    %505 = vmatprep.subr.mxu0 0.0
    %506 = vmatpush1.msra.mxu0 0.0
    %507 = vmatprep.subr.mxu0 0.0
    %508 = vmatpush1.msra.mxu0 0.0
    %509 = vmatprep.subr.mxu0 0.0
    %510 = vmatpush1.msra.mxu0 0.0
    %511 = vmatprep.subr.mxu0 0.0
    %512 = vmatpush1.msra.mxu0 0.0
    %513 = vmatprep.subr.mxu0 0.0
    %514 = vmatpush1.msra.mxu0 0.0
    %515 = vmatprep.subr.mxu0 0.0
    %516 = vmatpush1.msra.mxu0 0.0
    %517 = vmatprep.subr.mxu0 0.0
    %518 = vmatpush1.msra.mxu0 %v300
    %519 = vmatprep.subr.mxu0 0.0
    %520 = vmatpush2.msra.mxu0 0.0
    %521 = vmatprep.subr.mxu0 0.0
    %522 = vmatpush2.msra.mxu0 0.0
    %523 = vmatprep.subr.mxu0 0.0
    %524 = vmatpush2.msra.mxu0 0.0
    %525 = vmatprep.subr.mxu0 0.0
    %526 = vmatpush2.msra.mxu0 0.0
    %527 = vmatprep.subr.mxu0 0.0
    %528 = vmatpush2.msra.mxu0 0.0
    %529 = vmatprep.subr.mxu0 0.0
    %530 = vmatpush2.msra.mxu0 0.0
    %531 = vmatprep.subr.mxu0 0.0
    %532 = vmatpush2.msra.mxu0 0.0
    %533 = vmatprep.subr.mxu0 0.0
    %534 = vmatpush2.msra.mxu0 0.0
    %535 = vmatprep.subr.mxu0 0.0
    %536 = vmatpush2.msra.mxu0 0.0
    %537 = vmatprep.subr.mxu0 0.0
    %538 = vmatpush2.msra.mxu0 0.0
    %539 = vmatprep.subr.mxu0 0.0
    %540 = vmatpush2.msra.mxu0 0.0
    %541 = vmatprep.subr.mxu0 0.0
    %542 = vmatpush2.msra.mxu0 0.0
    %543 = vmatprep.subr.mxu0 0.0
    %544 = vmatpush2.msra.mxu0 0.0
    %545 = vmatprep.subr.mxu0 0.0
    %546 = vmatpush2.msra.mxu0 0.0
    %547 = vmatprep.subr.mxu0 0.0
    %548 = vmatpush2.msra.mxu0 0.0
    %549 = vmatprep.subr.mxu0 0.0
    %550 = vmatpush2.msra.mxu0 0.0
    %551 = vmatprep.mubr.f32.mxu0 0.0
    %552 = vmatmul.mubr.f32.gmra.mxu0 %v485
    %v553 = vpop.f32.mrf.mxu0
    %v554 = vadd.f32 %v33, %v553
    %v555 = vpop.f32.mrf.mxu0
    %556 = vdwg.mxu0
    %v558 = vsel %vm461, %v483, 0
    %560 = vmatprep.subr.mxu0 0.0
    %561 = vmatpush1.msra.mxu0 0.0
    %562 = vmatprep.subr.mxu0 0.0
    %563 = vmatpush1.msra.mxu0 0.0
    %564 = vmatprep.subr.mxu0 0.0
    %565 = vmatpush1.msra.mxu0 0.0
    %566 = vmatprep.subr.mxu0 0.0
    %567 = vmatpush1.msra.mxu0 0.0
    %568 = vmatprep.subr.mxu0 0.0
    %569 = vmatpush1.msra.mxu0 0.0
    %570 = vmatprep.subr.mxu0 0.0
    %571 = vmatpush1.msra.mxu0 0.0
    %572 = vmatprep.subr.mxu0 0.0
    %573 = vmatpush1.msra.mxu0 0.0
    %574 = vmatprep.subr.mxu0 0.0
    %575 = vmatpush1.msra.mxu0 0.0
    %576 = vmatprep.subr.mxu0 0.0
    %577 = vmatpush1.msra.mxu0 0.0
    %578 = vmatprep.subr.mxu0 0.0
    %579 = vmatpush1.msra.mxu0 0.0
    %580 = vmatprep.subr.mxu0 0.0
    %581 = vmatpush1.msra.mxu0 0.0
    %582 = vmatprep.subr.mxu0 0.0
    %583 = vmatpush1.msra.mxu0 0.0
    %584 = vmatprep.subr.mxu0 0.0
    %585 = vmatpush1.msra.mxu0 0.0
    %586 = vmatprep.subr.mxu0 0.0
    %587 = vmatpush1.msra.mxu0 0.0
    %588 = vmatprep.subr.mxu0 0.0
    %589 = vmatpush1.msra.mxu0 0.0
    %590 = vmatprep.subr.mxu0 0.0
    %591 = vmatpush1.msra.mxu0 %v305
    %592 = vmatprep.subr.mxu0 0.0
    %593 = vmatpush2.msra.mxu0 0.0
    %594 = vmatprep.subr.mxu0 0.0
    %595 = vmatpush2.msra.mxu0 0.0
    %596 = vmatprep.subr.mxu0 0.0
    %597 = vmatpush2.msra.mxu0 0.0
    %598 = vmatprep.subr.mxu0 0.0
    %599 = vmatpush2.msra.mxu0 0.0
    %600 = vmatprep.subr.mxu0 0.0
    %601 = vmatpush2.msra.mxu0 0.0
    %602 = vmatprep.subr.mxu0 0.0
    %603 = vmatpush2.msra.mxu0 0.0
    %604 = vmatprep.subr.mxu0 0.0
    %605 = vmatpush2.msra.mxu0 0.0
    %606 = vmatprep.subr.mxu0 0.0
    %607 = vmatpush2.msra.mxu0 0.0
    %608 = vmatprep.subr.mxu0 0.0
    %609 = vmatpush2.msra.mxu0 0.0
    %610 = vmatprep.subr.mxu0 0.0
    %611 = vmatpush2.msra.mxu0 0.0
    %612 = vmatprep.subr.mxu0 0.0
    %613 = vmatpush2.msra.mxu0 0.0
    %614 = vmatprep.subr.mxu0 0.0
    %615 = vmatpush2.msra.mxu0 0.0
    %616 = vmatprep.subr.mxu0 0.0
    %617 = vmatpush2.msra.mxu0 0.0
    %618 = vmatprep.subr.mxu0 0.0
    %619 = vmatpush2.msra.mxu0 0.0
    %620 = vmatprep.subr.mxu0 0.0
    %621 = vmatpush2.msra.mxu0 0.0
    %622 = vmatprep.subr.mxu0 0.0
    %623 = vmatpush2.msra.mxu0 0.0
    %624 = vmatprep.mubr.f32.mxu0 0.0
    %625 = vmatmul.mubr.f32.gmra.mxu0 %v558
    %v626 = vpop.f32.mrf.mxu0
    %v627 = vadd.f32 %v34, %v626
    %v628 = vpop.f32.mrf.mxu0
    %629 = vdwg.mxu0
    %630 = vst.msk [vmem:[#allocation2] sm:$0xff] %vm48, %v554
    %631 = vst.msk [vmem:[#allocation2 + $0x8] sm:$0xff] %vm48, %v627
    %632 = vst.msk [vmem:[#allocation4] sm:$0xff] %vm461, %v481
    %633 = vst.msk [vmem:[#allocation4 + $0x8] sm:$0xff] %vm461, %v483
    // Predicated region
    $region34: #{tpu_custom_call.1} parent=1 // pred_check
      _
    $region35: #{tpu_custom_call.1} parent=1 // pred_check_branch
      %635 = sbr.rel (0) target = $region37
    $region36: #{tpu_custom_call.1} parent=1 // pred_region
      %s637 = ssub.s32 256, 256
      %638 = vsyncadd [#allocation3], %s637
      %s639 = sshll.u32 [#allocation2], 4
      %s640 = int_to_ptr.vmem [resolvable:$true] %s639
      %645 = dma.vmem_to_hbm [thread:$0]  %s640, 256, %s8, [#allocation3], 128, 128, 8
    $region37: #{tpu_custom_call.1} parent=1 // pred_fallthru
      _
    // Predicated region
    $region38: #{tpu_custom_call.1} parent=1 // pred_check
      _
    $region39: #{tpu_custom_call.1} parent=1 // pred_check_branch
      %647 = sbr.rel (0) target = $region41
    $region40: #{tpu_custom_call.1} parent=1 // pred_region
      %s649 = ssub.s32 256, 256
      %650 = vsyncadd [#allocation5], %s649
      %s651 = sshll.u32 [#allocation4], 4
      %s652 = int_to_ptr.vmem [resolvable:$true] %s651
      %657 = dma.vmem_to_hbm [thread:$0]  %s652, 256, %s9, [#allocation5], 128, 128, 8
    $region41: #{tpu_custom_call.1} parent=1 // pred_fallthru
      _
    // Predicated region
    $region42: #{tpu_custom_call.1} parent=1 // pred_check
      _
    $region43: #{tpu_custom_call.1} parent=1 // pred_check_branch
      %659 = sbr.rel (0) target = $region45
    $region44: #{tpu_custom_call.1} parent=1 // pred_region
      %660 = dma.done [#allocation3], 256
    $region45: #{tpu_custom_call.1} parent=1 // pred_fallthru
      _
    // Predicated region
    $region46: #{tpu_custom_call.1} parent=1 // pred_check
      _
    $region47: #{tpu_custom_call.1} parent=1 // pred_check_branch
      %662 = sbr.rel (0) target = $region49
    $region48: #{tpu_custom_call.1} parent=1 // pred_region
      %663 = dma.done [#allocation5], 256
    $region49: #{tpu_custom_call.1} parent=1 // pred_fallthru
      _
    %664 = vsyncpa [#allocation3], 1
    %665 = vsyncpa [#allocation5], 1

</llo_original>
